<compile_context>
chip_gen: v5e
topology: v5e:2x2
jax: 0.10.0
libtpu: 0.0.40
codegen_flags: <defaults>
</compile_context>

<pallas_src>
import jax
import jax.numpy as jnp
from jax.experimental import pallas as pl
from jax.experimental.pallas import tpu as pltpu


def _regmap_kernel(x_ref, w_ref, o_ref, pad_ref):
    """Fused depthwise-3x3 + pointwise-1x1 + sigmoid for one batch element.

    x_ref  : (C, H, W)       VMEM, original dtype, unpadded
    w_ref  : (C*9,)          SMEM, f32, folded (pointwise * depthwise) tap weights
    o_ref  : (H, W)          VMEM, output dtype == input dtype
    pad_ref: (C, H+2, W+2)   VMEM f32 scratch: zero halo built in-kernel
    """
    C, H, W = x_ref.shape

    # Zero the halo scratch every grid step (cheap, VMEM-only). Re-done each step so the
    # kernel stays correct when the parallel batch axis is split across TensorCores.
    pad_ref[...] = jnp.zeros_like(pad_ref)

    acc = jnp.zeros((H, W), jnp.float32)
    # NOTE: C is small here; for large C switch this static unroll to
    # lax.fori_loop(..., unroll=True) over channel strips to bound vreg live ranges.
    for c in range(C):
        # Place this channel into the zero-padded scratch (padding=1 handled in-kernel,
        # so the wrapper never materializes a padded copy of x in HBM). Upcast here so
        # HBM/DMA traffic stays in the input dtype.
        pad_ref[c, pl.ds(1, H), pl.ds(1, W)] = x_ref[c].astype(jnp.float32)
        xp = pad_ref[c]                                   # (H+2, W+2), border is zero

        # 9-tap FMA straight into a single (H, W) accumulator; tap weights are SMEM
        # scalars with the pointwise 1x1 weight already folded in.
        for ki in range(3):
            for kj in range(3):
                acc = acc + w_ref[c * 9 + ki * 3 + kj] * xp[ki:ki + H, kj:kj + W]

    o_ref[...] = jax.nn.sigmoid(acc).astype(o_ref.dtype)


def regression_map_forward(x_nchw, dw_weight, pw_weight):
    """Forward of RegressionMap. Returns (mask, None) with mask shaped (N, 1, H, W)."""
    N, C, H, W = x_nchw.shape

    # Fold pointwise (1, C, 1, 1) into depthwise (C, 1, 3, 3):
    #   w_eff[c, ki, kj] = pw[c] * dw[c, ki, kj]  -> flattened (C*9,) f32 for SMEM.
    dw = dw_weight.reshape(C, 9).astype(jnp.float32)
    pw = pw_weight.reshape(C).astype(jnp.float32)
    w_eff = (dw * pw[:, None]).reshape(C * 9)

    # Raise the scoped VMEM limit only when a whole-image block actually needs it
    # (demo shapes stay far below the default). NOTE: for very large C*H*W (esp. v7x's
    # 64 MiB VMEM) the right fix is H-strip tiling with a 2-row halo, not a bigger limit.
    itemsize = x_nchw.dtype.itemsize
    block_bytes = (
        2 * C * H * W * itemsize              # double-buffered input block
        + C * (H + 2) * (W + 2) * 4           # padded f32 scratch
        + 2 * H * W * itemsize                # double-buffered output block
    )
    vmem_limit = None
    if block_bytes > 24 * 1024 * 1024:
        vmem_limit = min(2 * block_bytes, 100 * 1024 * 1024)

    out = pl.pallas_call(
        _regmap_kernel,
        out_shape=jax.ShapeDtypeStruct((N, H, W), x_nchw.dtype),
        grid_spec=pltpu.PrefetchScalarGridSpec(
            num_scalar_prefetch=0,
            grid=(N,),
            in_specs=[
                # One unpadded batch element per grid step (batch dim squeezed out).
                pl.BlockSpec((None, C, H, W), lambda n: (n, 0, 0, 0)),
                # Folded tap weights: whole array resident in SMEM, read as scalars.
                pl.BlockSpec(memory_space=pltpu.MemorySpace.SMEM),
            ],
            out_specs=pl.BlockSpec((None, H, W), lambda n: (n, 0, 0)),
            scratch_shapes=[pltpu.VMEM((C, H + 2, W + 2), jnp.float32)],
        ),
        compiler_params=pltpu.CompilerParams(
            dimension_semantics=("parallel",),
            vmem_limit_bytes=vmem_limit,
        ),
    )(x_nchw, w_eff)

    mask = out.reshape(N, 1, H, W)
    return mask, None


def _reference_forward(x_nchw, dw_weight, pw_weight):
    """Pure-JAX reference (NCHW separable conv + sigmoid) for a sanity check."""
    dn = jax.lax.conv_dimension_numbers(x_nchw.shape, dw_weight.shape, ("NCHW", "OIHW", "NCHW"))
    C = x_nchw.shape[1]
    dw_out = jax.lax.conv_general_dilated(
        x_nchw, dw_weight, window_strides=(1, 1), padding=((1, 1), (1, 1)),
        dimension_numbers=dn, feature_group_count=C)
    pw_out = jax.lax.conv_general_dilated(
        dw_out, pw_weight, window_strides=(1, 1), padding="VALID",
        dimension_numbers=jax.lax.conv_dimension_numbers(
            dw_out.shape, pw_weight.shape, ("NCHW", "OIHW", "NCHW")))
    return jax.nn.sigmoid(pw_out)


if __name__ == "__main__":
    key = jax.random.PRNGKey(0)
    kx, kd, kp = jax.random.split(key, 3)

    N, C, H, W = 2, 4, 16, 16
    x = jax.random.normal(kx, (N, C, H, W), dtype=jnp.float32)

    # Parameter shapes match the PyTorch module:
    #   depthwise Conv2d(c_in, c_in, 3, groups=c_in, bias=False) -> weight (C, 1, 3, 3)
    #   pointwise Conv2d(c_in, 1, 1, bias=False)                 -> weight (1, C, 1, 1)
    dw_weight = 0.1 * jax.random.normal(kd, (C, 1, 3, 3), dtype=jnp.float32)
    pw_weight = 0.1 * jax.random.normal(kp, (1, C, 1, 1), dtype=jnp.float32)

    mask, none_out = regression_map_forward(x, dw_weight, pw_weight)
    jax.block_until_ready(mask)

    ref = _reference_forward(x, dw_weight, pw_weight)
    assert mask.shape == (N, 1, H, W)
    assert none_out is None
    assert jnp.allclose(mask, ref, atol=1e-5, rtol=1e-5)

    print("KERNEL_OK")
</pallas_src>

<mosaic_0001>
module attributes {stable_mosaic.version = 11 : i64} {
  func.func @_regmap_kernel(%arg0: i32, %arg1: memref<1x4x16x16xf32, #tpu.memory_space<vmem>>, %arg2: memref<36xf32, #tpu.memory_space<smem>>, %arg3: memref<1x16x16xf32, #tpu.memory_space<vmem>>, %arg4: memref<4x18x18xf32, #tpu.memory_space<vmem>>) attributes {dimension_semantics = [#tpu.dimension_semantics<parallel>], iteration_bounds = array<i64: 2>, scalar_prefetch = 0 : i64, scratch_operands = 1 : i64, tpu.core_type = #tpu.core_type<tc>, window_params = [{transform_indices = @transform_0, window_bounds = array<i64: 1, 4, 16, 16>}, {transform_indices = @transform_1, window_bounds = array<i64: 36>}, {transform_indices = @transform_2, window_bounds = array<i64: 1, 16, 16>}]} {
    %cst = arith.constant 0.000000e+00 : f32
    %0 = vector.broadcast %cst : f32 to vector<4x18x18xf32>
    %c0 = arith.constant 0 : index
    %c0_0 = arith.constant 0 : index
    %c0_1 = arith.constant 0 : index
    %1 = vector.load %arg4[%c0, %c0_0, %c0_1] : memref<4x18x18xf32, #tpu.memory_space<vmem>>, vector<4x18x18xf32>
    tpu.vector_store %arg4[%c0, %c0_0, %c0_1], %0 {strides = array<i32>} : memref<4x18x18xf32, #tpu.memory_space<vmem>>, vector<4x18x18xf32>,
    %cst_2 = arith.constant 0.000000e+00 : f32
    %2 = vector.broadcast %cst_2 : f32 to vector<16x16xf32>
    %c0_3 = arith.constant 0 : index
    %c0_4 = arith.constant 0 : index
    %c0_5 = arith.constant 0 : index
    %c0_6 = arith.constant 0 : index
    %3 = vector.load %arg1[%c0_3, %c0_4, %c0_5, %c0_6] : memref<1x4x16x16xf32, #tpu.memory_space<vmem>>, vector<1x1x16x16xf32>
    %4 = vector.shape_cast %3 : vector<1x1x16x16xf32> to vector<16x16xf32>
    %c0_7 = arith.constant 0 : index
    %c1 = arith.constant 1 : index
    %c1_8 = arith.constant 1 : index
    %5 = vector.load %arg4[%c0_7, %c1, %c1_8] : memref<4x18x18xf32, #tpu.memory_space<vmem>>, vector<1x16x16xf32>
    %6 = vector.shape_cast %5 : vector<1x16x16xf32> to vector<16x16xf32>
    %7 = vector.shape_cast %4 : vector<16x16xf32> to vector<1x16x16xf32>
    tpu.vector_store %arg4[%c0_7, %c1, %c1_8], %7 {strides = array<i32>} : memref<4x18x18xf32, #tpu.memory_space<vmem>>, vector<1x16x16xf32>,
    %c0_9 = arith.constant 0 : index
    %c0_10 = arith.constant 0 : index
    %c0_11 = arith.constant 0 : index
    %8 = vector.load %arg4[%c0_9, %c0_10, %c0_11] : memref<4x18x18xf32, #tpu.memory_space<vmem>>, vector<1x18x18xf32>
    %9 = vector.shape_cast %8 : vector<1x18x18xf32> to vector<18x18xf32>
    %c0_12 = arith.constant 0 : index
    %10 = memref.load %arg2[%c0_12] : memref<36xf32, #tpu.memory_space<smem>>
    %11 = vector.extract_strided_slice %9 {offsets = [0, 0], sizes = [16, 16], strides = [1, 1]} : vector<18x18xf32> to vector<16x16xf32>
    %12 = vector.broadcast %10 : f32 to vector<16x16xf32>
    %13 = arith.mulf %12, %11 : vector<16x16xf32>
    %14 = arith.addf %2, %13 : vector<16x16xf32>
    %c1_13 = arith.constant 1 : index
    %15 = memref.load %arg2[%c1_13] : memref<36xf32, #tpu.memory_space<smem>>
    %16 = vector.extract_strided_slice %9 {offsets = [0, 1], sizes = [16, 16], strides = [1, 1]} : vector<18x18xf32> to vector<16x16xf32>
    %17 = vector.broadcast %15 : f32 to vector<16x16xf32>
    %18 = arith.mulf %17, %16 : vector<16x16xf32>
    %19 = arith.addf %14, %18 : vector<16x16xf32>
    %c2 = arith.constant 2 : index
    %20 = memref.load %arg2[%c2] : memref<36xf32, #tpu.memory_space<smem>>
    %21 = vector.extract_strided_slice %9 {offsets = [0, 2], sizes = [16, 16], strides = [1, 1]} : vector<18x18xf32> to vector<16x16xf32>
    %22 = vector.broadcast %20 : f32 to vector<16x16xf32>
    %23 = arith.mulf %22, %21 : vector<16x16xf32>
    %24 = arith.addf %19, %23 : vector<16x16xf32>
    %c3 = arith.constant 3 : index
    %25 = memref.load %arg2[%c3] : memref<36xf32, #tpu.memory_space<smem>>
    %26 = vector.extract_strided_slice %9 {offsets = [1, 0], sizes = [16, 16], strides = [1, 1]} : vector<18x18xf32> to vector<16x16xf32>
    %27 = vector.broadcast %25 : f32 to vector<16x16xf32>
    %28 = arith.mulf %27, %26 : vector<16x16xf32>
    %29 = arith.addf %24, %28 : vector<16x16xf32>
    %c4 = arith.constant 4 : index
    %30 = memref.load %arg2[%c4] : memref<36xf32, #tpu.memory_space<smem>>
    %31 = vector.extract_strided_slice %9 {offsets = [1, 1], sizes = [16, 16], strides = [1, 1]} : vector<18x18xf32> to vector<16x16xf32>
    %32 = vector.broadcast %30 : f32 to vector<16x16xf32>
    %33 = arith.mulf %32, %31 : vector<16x16xf32>
    %34 = arith.addf %29, %33 : vector<16x16xf32>
    %c5 = arith.constant 5 : index
    %35 = memref.load %arg2[%c5] : memref<36xf32, #tpu.memory_space<smem>>
    %36 = vector.extract_strided_slice %9 {offsets = [1, 2], sizes = [16, 16], strides = [1, 1]} : vector<18x18xf32> to vector<16x16xf32>
    %37 = vector.broadcast %35 : f32 to vector<16x16xf32>
    %38 = arith.mulf %37, %36 : vector<16x16xf32>
    %39 = arith.addf %34, %38 : vector<16x16xf32>
    %c6 = arith.constant 6 : index
    %40 = memref.load %arg2[%c6] : memref<36xf32, #tpu.memory_space<smem>>
    %41 = vector.extract_strided_slice %9 {offsets = [2, 0], sizes = [16, 16], strides = [1, 1]} : vector<18x18xf32> to vector<16x16xf32>
    %42 = vector.broadcast %40 : f32 to vector<16x16xf32>
    %43 = arith.mulf %42, %41 : vector<16x16xf32>
    %44 = arith.addf %39, %43 : vector<16x16xf32>
    %c7 = arith.constant 7 : index
    %45 = memref.load %arg2[%c7] : memref<36xf32, #tpu.memory_space<smem>>
    %46 = vector.extract_strided_slice %9 {offsets = [2, 1], sizes = [16, 16], strides = [1, 1]} : vector<18x18xf32> to vector<16x16xf32>
    %47 = vector.broadcast %45 : f32 to vector<16x16xf32>
    %48 = arith.mulf %47, %46 : vector<16x16xf32>
    %49 = arith.addf %44, %48 : vector<16x16xf32>
    %c8 = arith.constant 8 : index
    %50 = memref.load %arg2[%c8] : memref<36xf32, #tpu.memory_space<smem>>
    %51 = vector.extract_strided_slice %9 {offsets = [2, 2], sizes = [16, 16], strides = [1, 1]} : vector<18x18xf32> to vector<16x16xf32>
    %52 = vector.broadcast %50 : f32 to vector<16x16xf32>
    %53 = arith.mulf %52, %51 : vector<16x16xf32>
    %54 = arith.addf %49, %53 : vector<16x16xf32>
    %c0_14 = arith.constant 0 : index
    %c1_15 = arith.constant 1 : index
    %c0_16 = arith.constant 0 : index
    %c0_17 = arith.constant 0 : index
    %55 = vector.load %arg1[%c0_14, %c1_15, %c0_16, %c0_17] : memref<1x4x16x16xf32, #tpu.memory_space<vmem>>, vector<1x1x16x16xf32>
    %56 = vector.shape_cast %55 : vector<1x1x16x16xf32> to vector<16x16xf32>
    %c1_18 = arith.constant 1 : index
    %c1_19 = arith.constant 1 : index
    %c1_20 = arith.constant 1 : index
    %57 = vector.load %arg4[%c1_18, %c1_19, %c1_20] : memref<4x18x18xf32, #tpu.memory_space<vmem>>, vector<1x16x16xf32>
    %58 = vector.shape_cast %57 : vector<1x16x16xf32> to vector<16x16xf32>
    %59 = vector.shape_cast %56 : vector<16x16xf32> to vector<1x16x16xf32>
    tpu.vector_store %arg4[%c1_18, %c1_19, %c1_20], %59 {strides = array<i32>} : memref<4x18x18xf32, #tpu.memory_space<vmem>>, vector<1x16x16xf32>,
    %c1_21 = arith.constant 1 : index
    %c0_22 = arith.constant 0 : index
    %c0_23 = arith.constant 0 : index
    %60 = vector.load %arg4[%c1_21, %c0_22, %c0_23] : memref<4x18x18xf32, #tpu.memory_space<vmem>>, vector<1x18x18xf32>
    %61 = vector.shape_cast %60 : vector<1x18x18xf32> to vector<18x18xf32>
    %c9 = arith.constant 9 : index
    %62 = memref.load %arg2[%c9] : memref<36xf32, #tpu.memory_space<smem>>
    %63 = vector.extract_strided_slice %61 {offsets = [0, 0], sizes = [16, 16], strides = [1, 1]} : vector<18x18xf32> to vector<16x16xf32>
    %64 = vector.broadcast %62 : f32 to vector<16x16xf32>
    %65 = arith.mulf %64, %63 : vector<16x16xf32>
    %66 = arith.addf %54, %65 : vector<16x16xf32>
    %c10 = arith.constant 10 : index
    %67 = memref.load %arg2[%c10] : memref<36xf32, #tpu.memory_space<smem>>
    %68 = vector.extract_strided_slice %61 {offsets = [0, 1], sizes = [16, 16], strides = [1, 1]} : vector<18x18xf32> to vector<16x16xf32>
    %69 = vector.broadcast %67 : f32 to vector<16x16xf32>
    %70 = arith.mulf %69, %68 : vector<16x16xf32>
    %71 = arith.addf %66, %70 : vector<16x16xf32>
    %c11 = arith.constant 11 : index
    %72 = memref.load %arg2[%c11] : memref<36xf32, #tpu.memory_space<smem>>
    %73 = vector.extract_strided_slice %61 {offsets = [0, 2], sizes = [16, 16], strides = [1, 1]} : vector<18x18xf32> to vector<16x16xf32>
    %74 = vector.broadcast %72 : f32 to vector<16x16xf32>
    %75 = arith.mulf %74, %73 : vector<16x16xf32>
    %76 = arith.addf %71, %75 : vector<16x16xf32>
    %c12 = arith.constant 12 : index
    %77 = memref.load %arg2[%c12] : memref<36xf32, #tpu.memory_space<smem>>
    %78 = vector.extract_strided_slice %61 {offsets = [1, 0], sizes = [16, 16], strides = [1, 1]} : vector<18x18xf32> to vector<16x16xf32>
    %79 = vector.broadcast %77 : f32 to vector<16x16xf32>
    %80 = arith.mulf %79, %78 : vector<16x16xf32>
    %81 = arith.addf %76, %80 : vector<16x16xf32>
    %c13 = arith.constant 13 : index
    %82 = memref.load %arg2[%c13] : memref<36xf32, #tpu.memory_space<smem>>
    %83 = vector.extract_strided_slice %61 {offsets = [1, 1], sizes = [16, 16], strides = [1, 1]} : vector<18x18xf32> to vector<16x16xf32>
    %84 = vector.broadcast %82 : f32 to vector<16x16xf32>
    %85 = arith.mulf %84, %83 : vector<16x16xf32>
    %86 = arith.addf %81, %85 : vector<16x16xf32>
    %c14 = arith.constant 14 : index
    %87 = memref.load %arg2[%c14] : memref<36xf32, #tpu.memory_space<smem>>
    %88 = vector.extract_strided_slice %61 {offsets = [1, 2], sizes = [16, 16], strides = [1, 1]} : vector<18x18xf32> to vector<16x16xf32>
    %89 = vector.broadcast %87 : f32 to vector<16x16xf32>
    %90 = arith.mulf %89, %88 : vector<16x16xf32>
    %91 = arith.addf %86, %90 : vector<16x16xf32>
    %c15 = arith.constant 15 : index
    %92 = memref.load %arg2[%c15] : memref<36xf32, #tpu.memory_space<smem>>
    %93 = vector.extract_strided_slice %61 {offsets = [2, 0], sizes = [16, 16], strides = [1, 1]} : vector<18x18xf32> to vector<16x16xf32>
    %94 = vector.broadcast %92 : f32 to vector<16x16xf32>
    %95 = arith.mulf %94, %93 : vector<16x16xf32>
    %96 = arith.addf %91, %95 : vector<16x16xf32>
    %c16 = arith.constant 16 : index
    %97 = memref.load %arg2[%c16] : memref<36xf32, #tpu.memory_space<smem>>
    %98 = vector.extract_strided_slice %61 {offsets = [2, 1], sizes = [16, 16], strides = [1, 1]} : vector<18x18xf32> to vector<16x16xf32>
    %99 = vector.broadcast %97 : f32 to vector<16x16xf32>
    %100 = arith.mulf %99, %98 : vector<16x16xf32>
    %101 = arith.addf %96, %100 : vector<16x16xf32>
    %c17 = arith.constant 17 : index
    %102 = memref.load %arg2[%c17] : memref<36xf32, #tpu.memory_space<smem>>
    %103 = vector.extract_strided_slice %61 {offsets = [2, 2], sizes = [16, 16], strides = [1, 1]} : vector<18x18xf32> to vector<16x16xf32>
    %104 = vector.broadcast %102 : f32 to vector<16x16xf32>
    %105 = arith.mulf %104, %103 : vector<16x16xf32>
    %106 = arith.addf %101, %105 : vector<16x16xf32>
    %c0_24 = arith.constant 0 : index
    %c2_25 = arith.constant 2 : index
    %c0_26 = arith.constant 0 : index
    %c0_27 = arith.constant 0 : index
    %107 = vector.load %arg1[%c0_24, %c2_25, %c0_26, %c0_27] : memref<1x4x16x16xf32, #tpu.memory_space<vmem>>, vector<1x1x16x16xf32>
    %108 = vector.shape_cast %107 : vector<1x1x16x16xf32> to vector<16x16xf32>
    %c2_28 = arith.constant 2 : index
    %c1_29 = arith.constant 1 : index
    %c1_30 = arith.constant 1 : index
    %109 = vector.load %arg4[%c2_28, %c1_29, %c1_30] : memref<4x18x18xf32, #tpu.memory_space<vmem>>, vector<1x16x16xf32>
    %110 = vector.shape_cast %109 : vector<1x16x16xf32> to vector<16x16xf32>
    %111 = vector.shape_cast %108 : vector<16x16xf32> to vector<1x16x16xf32>
    tpu.vector_store %arg4[%c2_28, %c1_29, %c1_30], %111 {strides = array<i32>} : memref<4x18x18xf32, #tpu.memory_space<vmem>>, vector<1x16x16xf32>,
    %c2_31 = arith.constant 2 : index
    %c0_32 = arith.constant 0 : index
    %c0_33 = arith.constant 0 : index
    %112 = vector.load %arg4[%c2_31, %c0_32, %c0_33] : memref<4x18x18xf32, #tpu.memory_space<vmem>>, vector<1x18x18xf32>
    %113 = vector.shape_cast %112 : vector<1x18x18xf32> to vector<18x18xf32>
    %c18 = arith.constant 18 : index
    %114 = memref.load %arg2[%c18] : memref<36xf32, #tpu.memory_space<smem>>
    %115 = vector.extract_strided_slice %113 {offsets = [0, 0], sizes = [16, 16], strides = [1, 1]} : vector<18x18xf32> to vector<16x16xf32>
    %116 = vector.broadcast %114 : f32 to vector<16x16xf32>
    %117 = arith.mulf %116, %115 : vector<16x16xf32>
    %118 = arith.addf %106, %117 : vector<16x16xf32>
    %c19 = arith.constant 19 : index
    %119 = memref.load %arg2[%c19] : memref<36xf32, #tpu.memory_space<smem>>
    %120 = vector.extract_strided_slice %113 {offsets = [0, 1], sizes = [16, 16], strides = [1, 1]} : vector<18x18xf32> to vector<16x16xf32>
    %121 = vector.broadcast %119 : f32 to vector<16x16xf32>
    %122 = arith.mulf %121, %120 : vector<16x16xf32>
    %123 = arith.addf %118, %122 : vector<16x16xf32>
    %c20 = arith.constant 20 : index
    %124 = memref.load %arg2[%c20] : memref<36xf32, #tpu.memory_space<smem>>
    %125 = vector.extract_strided_slice %113 {offsets = [0, 2], sizes = [16, 16], strides = [1, 1]} : vector<18x18xf32> to vector<16x16xf32>
    %126 = vector.broadcast %124 : f32 to vector<16x16xf32>
    %127 = arith.mulf %126, %125 : vector<16x16xf32>
    %128 = arith.addf %123, %127 : vector<16x16xf32>
    %c21 = arith.constant 21 : index
    %129 = memref.load %arg2[%c21] : memref<36xf32, #tpu.memory_space<smem>>
    %130 = vector.extract_strided_slice %113 {offsets = [1, 0], sizes = [16, 16], strides = [1, 1]} : vector<18x18xf32> to vector<16x16xf32>
    %131 = vector.broadcast %129 : f32 to vector<16x16xf32>
    %132 = arith.mulf %131, %130 : vector<16x16xf32>
    %133 = arith.addf %128, %132 : vector<16x16xf32>
    %c22 = arith.constant 22 : index
    %134 = memref.load %arg2[%c22] : memref<36xf32, #tpu.memory_space<smem>>
    %135 = vector.extract_strided_slice %113 {offsets = [1, 1], sizes = [16, 16], strides = [1, 1]} : vector<18x18xf32> to vector<16x16xf32>
    %136 = vector.broadcast %134 : f32 to vector<16x16xf32>
    %137 = arith.mulf %136, %135 : vector<16x16xf32>
    %138 = arith.addf %133, %137 : vector<16x16xf32>
    %c23 = arith.constant 23 : index
    %139 = memref.load %arg2[%c23] : memref<36xf32, #tpu.memory_space<smem>>
    %140 = vector.extract_strided_slice %113 {offsets = [1, 2], sizes = [16, 16], strides = [1, 1]} : vector<18x18xf32> to vector<16x16xf32>
    %141 = vector.broadcast %139 : f32 to vector<16x16xf32>
    %142 = arith.mulf %141, %140 : vector<16x16xf32>
    %143 = arith.addf %138, %142 : vector<16x16xf32>
    %c24 = arith.constant 24 : index
    %144 = memref.load %arg2[%c24] : memref<36xf32, #tpu.memory_space<smem>>
    %145 = vector.extract_strided_slice %113 {offsets = [2, 0], sizes = [16, 16], strides = [1, 1]} : vector<18x18xf32> to vector<16x16xf32>
    %146 = vector.broadcast %144 : f32 to vector<16x16xf32>
    %147 = arith.mulf %146, %145 : vector<16x16xf32>
    %148 = arith.addf %143, %147 : vector<16x16xf32>
    %c25 = arith.constant 25 : index
    %149 = memref.load %arg2[%c25] : memref<36xf32, #tpu.memory_space<smem>>
    %150 = vector.extract_strided_slice %113 {offsets = [2, 1], sizes = [16, 16], strides = [1, 1]} : vector<18x18xf32> to vector<16x16xf32>
    %151 = vector.broadcast %149 : f32 to vector<16x16xf32>
    %152 = arith.mulf %151, %150 : vector<16x16xf32>
    %153 = arith.addf %148, %152 : vector<16x16xf32>
    %c26 = arith.constant 26 : index
    %154 = memref.load %arg2[%c26] : memref<36xf32, #tpu.memory_space<smem>>
    %155 = vector.extract_strided_slice %113 {offsets = [2, 2], sizes = [16, 16], strides = [1, 1]} : vector<18x18xf32> to vector<16x16xf32>
    %156 = vector.broadcast %154 : f32 to vector<16x16xf32>
    %157 = arith.mulf %156, %155 : vector<16x16xf32>
    %158 = arith.addf %153, %157 : vector<16x16xf32>
    %c0_34 = arith.constant 0 : index
    %c3_35 = arith.constant 3 : index
    %c0_36 = arith.constant 0 : index
    %c0_37 = arith.constant 0 : index
    %159 = vector.load %arg1[%c0_34, %c3_35, %c0_36, %c0_37] : memref<1x4x16x16xf32, #tpu.memory_space<vmem>>, vector<1x1x16x16xf32>
    %160 = vector.shape_cast %159 : vector<1x1x16x16xf32> to vector<16x16xf32>
    %c3_38 = arith.constant 3 : index
    %c1_39 = arith.constant 1 : index
    %c1_40 = arith.constant 1 : index
    %161 = vector.load %arg4[%c3_38, %c1_39, %c1_40] : memref<4x18x18xf32, #tpu.memory_space<vmem>>, vector<1x16x16xf32>
    %162 = vector.shape_cast %161 : vector<1x16x16xf32> to vector<16x16xf32>
    %163 = vector.shape_cast %160 : vector<16x16xf32> to vector<1x16x16xf32>
    tpu.vector_store %arg4[%c3_38, %c1_39, %c1_40], %163 {strides = array<i32>} : memref<4x18x18xf32, #tpu.memory_space<vmem>>, vector<1x16x16xf32>,
    %c3_41 = arith.constant 3 : index
    %c0_42 = arith.constant 0 : index
    %c0_43 = arith.constant 0 : index
    %164 = vector.load %arg4[%c3_41, %c0_42, %c0_43] : memref<4x18x18xf32, #tpu.memory_space<vmem>>, vector<1x18x18xf32>
    %165 = vector.shape_cast %164 : vector<1x18x18xf32> to vector<18x18xf32>
    %c27 = arith.constant 27 : index
    %166 = memref.load %arg2[%c27] : memref<36xf32, #tpu.memory_space<smem>>
    %167 = vector.extract_strided_slice %165 {offsets = [0, 0], sizes = [16, 16], strides = [1, 1]} : vector<18x18xf32> to vector<16x16xf32>
    %168 = vector.broadcast %166 : f32 to vector<16x16xf32>
    %169 = arith.mulf %168, %167 : vector<16x16xf32>
    %170 = arith.addf %158, %169 : vector<16x16xf32>
    %c28 = arith.constant 28 : index
    %171 = memref.load %arg2[%c28] : memref<36xf32, #tpu.memory_space<smem>>
    %172 = vector.extract_strided_slice %165 {offsets = [0, 1], sizes = [16, 16], strides = [1, 1]} : vector<18x18xf32> to vector<16x16xf32>
    %173 = vector.broadcast %171 : f32 to vector<16x16xf32>
    %174 = arith.mulf %173, %172 : vector<16x16xf32>
    %175 = arith.addf %170, %174 : vector<16x16xf32>
    %c29 = arith.constant 29 : index
    %176 = memref.load %arg2[%c29] : memref<36xf32, #tpu.memory_space<smem>>
    %177 = vector.extract_strided_slice %165 {offsets = [0, 2], sizes = [16, 16], strides = [1, 1]} : vector<18x18xf32> to vector<16x16xf32>
    %178 = vector.broadcast %176 : f32 to vector<16x16xf32>
    %179 = arith.mulf %178, %177 : vector<16x16xf32>
    %180 = arith.addf %175, %179 : vector<16x16xf32>
    %c30 = arith.constant 30 : index
    %181 = memref.load %arg2[%c30] : memref<36xf32, #tpu.memory_space<smem>>
    %182 = vector.extract_strided_slice %165 {offsets = [1, 0], sizes = [16, 16], strides = [1, 1]} : vector<18x18xf32> to vector<16x16xf32>
    %183 = vector.broadcast %181 : f32 to vector<16x16xf32>
    %184 = arith.mulf %183, %182 : vector<16x16xf32>
    %185 = arith.addf %180, %184 : vector<16x16xf32>
    %c31 = arith.constant 31 : index
    %186 = memref.load %arg2[%c31] : memref<36xf32, #tpu.memory_space<smem>>
    %187 = vector.extract_strided_slice %165 {offsets = [1, 1], sizes = [16, 16], strides = [1, 1]} : vector<18x18xf32> to vector<16x16xf32>
    %188 = vector.broadcast %186 : f32 to vector<16x16xf32>
    %189 = arith.mulf %188, %187 : vector<16x16xf32>
    %190 = arith.addf %185, %189 : vector<16x16xf32>
    %c32 = arith.constant 32 : index
    %191 = memref.load %arg2[%c32] : memref<36xf32, #tpu.memory_space<smem>>
    %192 = vector.extract_strided_slice %165 {offsets = [1, 2], sizes = [16, 16], strides = [1, 1]} : vector<18x18xf32> to vector<16x16xf32>
    %193 = vector.broadcast %191 : f32 to vector<16x16xf32>
    %194 = arith.mulf %193, %192 : vector<16x16xf32>
    %195 = arith.addf %190, %194 : vector<16x16xf32>
    %c33 = arith.constant 33 : index
    %196 = memref.load %arg2[%c33] : memref<36xf32, #tpu.memory_space<smem>>
    %197 = vector.extract_strided_slice %165 {offsets = [2, 0], sizes = [16, 16], strides = [1, 1]} : vector<18x18xf32> to vector<16x16xf32>
    %198 = vector.broadcast %196 : f32 to vector<16x16xf32>
    %199 = arith.mulf %198, %197 : vector<16x16xf32>
    %200 = arith.addf %195, %199 : vector<16x16xf32>
    %c34 = arith.constant 34 : index
    %201 = memref.load %arg2[%c34] : memref<36xf32, #tpu.memory_space<smem>>
    %202 = vector.extract_strided_slice %165 {offsets = [2, 1], sizes = [16, 16], strides = [1, 1]} : vector<18x18xf32> to vector<16x16xf32>
    %203 = vector.broadcast %201 : f32 to vector<16x16xf32>
    %204 = arith.mulf %203, %202 : vector<16x16xf32>
    %205 = arith.addf %200, %204 : vector<16x16xf32>
    %c35 = arith.constant 35 : index
    %206 = memref.load %arg2[%c35] : memref<36xf32, #tpu.memory_space<smem>>
    %207 = vector.extract_strided_slice %165 {offsets = [2, 2], sizes = [16, 16], strides = [1, 1]} : vector<18x18xf32> to vector<16x16xf32>
    %208 = vector.broadcast %206 : f32 to vector<16x16xf32>
    %209 = arith.mulf %208, %207 : vector<16x16xf32>
    %210 = arith.addf %205, %209 : vector<16x16xf32>
    %211 = arith.negf %210 : vector<16x16xf32>
    %212 = math.exp %211 : vector<16x16xf32>
    %cst_44 = arith.constant 1.000000e+00 : f32
    %213 = vector.broadcast %cst_44 : f32 to vector<16x16xf32>
    %214 = arith.addf %213, %212 : vector<16x16xf32>
    %215 = arith.divf %213, %214 : vector<16x16xf32>
    %c0_45 = arith.constant 0 : index
    %c0_46 = arith.constant 0 : index
    %c0_47 = arith.constant 0 : index
    %216 = vector.load %arg3[%c0_45, %c0_46, %c0_47] : memref<1x16x16xf32, #tpu.memory_space<vmem>>, vector<1x16x16xf32>
    %217 = vector.shape_cast %216 : vector<1x16x16xf32> to vector<16x16xf32>
    %218 = vector.shape_cast %215 : vector<16x16xf32> to vector<1x16x16xf32>
    tpu.vector_store %arg3[%c0_45, %c0_46, %c0_47], %218 {strides = array<i32>} : memref<1x16x16xf32, #tpu.memory_space<vmem>>, vector<1x16x16xf32>,
    return
  }
  func.func @transform_0(%arg0: i32) -> (i32, i32, i32, i32) {
    %c0_i32 = arith.constant 0 : i32
    %c0_i32_0 = arith.constant 0 : i32
    %c0_i32_1 = arith.constant 0 : i32
    %c0_i32_2 = arith.constant 0 : i32
    return %arg0, %c0_i32, %c0_i32_0, %c0_i32_1 : i32, i32, i32, i32
  }
  func.func @transform_1(%arg0: i32) -> i32 {
    %c0_i32 = arith.constant 0 : i32
    %c0_i32_0 = arith.constant 0 : i32
    return %c0_i32 : i32
  }
  func.func @transform_2(%arg0: i32) -> (i32, i32, i32) {
    %c0_i32 = arith.constant 0 : i32
    %c0_i32_0 = arith.constant 0 : i32
    %c0_i32_1 = arith.constant 0 : i32
    return %arg0, %c0_i32, %c0_i32_0 : i32, i32, i32
  }
}

</mosaic_0001>

<llo_original>
// kernel: tpu_custom_call.1
$region0: #{tpu_custom_call.1}
  #allocation0 [shape = 'u32[]', space=smem, size = 0x4, offset = 0x4, fixed_abs, tag = 'smem constant byte address 0x4 - core index']
  #allocation1 [shape = 'u32[72,128]{1,0:T(1,128)}', space=vmem, size = 0x9000, scoped, tag = 'internal scratch']
  #allocation2 [shape = 'f32[4,18,18]{2,1,0:T(8,128)}', space=vmem, size = 0xc000, scoped, tag = 'scratch operand']
  %s0 = inlined_call_operand.hbm [shape: f32[2,4,16,16], index: 0, kind: input, shape index: {}]
  %s1 = inlined_call_operand.hbm [shape: f32[36], index: 1, kind: input, shape index: {}]
  %s2 = inlined_call_operand.hbm [shape: f32[2,16,16], index: 2, kind: output, shape index: {}]
  %s3 = sld [smem:[#allocation0]]
  $region49: #{tpu_custom_call.1} parent=0
    _
  %s5 = ssub.s32 1, %s3
  %s6 = scalar_select 0, %s5, %s3
  $region1: #{tpu_custom_call.1} parent=0
    #allocation3 [shape = 'u8[65536]{0}', space=vmem, size = 0x10000, scoped, tag = 'input window, operand 0']
    #allocation4 [shape = 's32[2]{0}', space=sflag, size = 0x8, scoped, tag = 'scoped memory for tpu_custom_call.1']
    #allocation5 [shape = 's32[2]{0}', space=sflag, size = 0x8, scoped, tag = 'scoped memory for tpu_custom_call.1']
    #allocation6 [shape = 's32[2]{0}', space=sflag, size = 0x8, scoped, tag = 'scoped memory for tpu_custom_call.1']
    #allocation7 [shape = 'u8[512]{0}', space=smem, size = 0x200, scoped, tag = 'input window, operand 1, single buffered']
    #allocation8 [shape = 'u8[16384]{0}', space=vmem, size = 0x4000, scoped, tag = 'output window, operand 0']
    %7 = vsyncpa [#allocation4], 0
    %s8 = scalar_lea.sflag [#allocation4], 1
    %9 = vsyncpa %s8, 0
    %10 = vsyncpa [#allocation6], 0
    %11 = vsyncpa [#allocation5], 0
    %s12 = scalar_lea.sflag [#allocation5], 1
    %13 = vsyncpa %s12, 0
    loop: start=0, step=1, limit=4
    $region2: #{tpu_custom_call.1} parent=1 // loop_pre_header
      _
    $region3: #{tpu_custom_call.1} parent=1 // loop_header
      %s15 = sphi 0, %s19
      %p16 = scmp.ge.s32.totalorder %s15, 4
      %s25 = sphi 0, %s27
      %s28 = sphi 0, %s25
      %s29 = sphi 0, %s28
      %s45 = sphi 0, %s29
      %s49 = sphi 0, %s49
      %s51 = sphi 0, %s49
      %s52 = sphi 0, %s51
      %s66 = sphi 0, %s52
      %s72 = sphi 0, %s74
      %s75 = sphi 0, %s72
      %s76 = sphi 0, %s75
      %s92 = sphi 0, %s76
    $region4: #{tpu_custom_call.1} parent=1 // loop_header_branch
      %18 = sbr.rel (%p16) target = $region8
    $region5: #{tpu_custom_call.1} parent=1 // loop_body
      %s20 = ssub.s32 %s15, 1
      %s21 = ssub.s32 %s15, 2
      %s22 = sadd.s32 %s15, 1
      %s23 = ssub.s32 %s15, %s22
      %p24 = scmp.eq.s32.totalorder %s23, 0
      %s26 = sadd.s32 %s25, 1
      %s27 = scalar_select %p24, %s25, %s26
      %p30 = pneg %p24
      %p31 = scmp.eq.s32.totalorder %s15, 1
      %p32 = por %p30, %p31
      %p33 = scmp.ne.s32.totalorder %s25, %s28
      %p34 = scmp.eq.s32.totalorder %s15, 0
      %p35 = por %p33, %p34
      %p36 = scmp.ne.s32.totalorder %s25, %s28
      %p37 = scmp.eq.s32.totalorder %s20, 1
      %p38 = por %p36, %p37
      %p39 = scmp.ne.s32.totalorder %s28, %s29
      %p40 = scmp.eq.s32.totalorder %s20, 0
      %p41 = por %p39, %p40
      %p42 = scmp.ne.s32.totalorder %s28, %s29
      %p43 = scmp.eq.s32.totalorder %s21, 1
      %p44 = por %p42, %p43
      %p46 = scmp.ne.s32.totalorder %s29, %s45
      %p47 = scmp.eq.s32.totalorder %s21, 0
      %p48 = por %p46, %p47
      %s50 = sadd.s32 %s49, 1
      %p53 = scmp.eq.s32.totalorder %s15, 1
      %p54 = scmp.ne.s32.totalorder %s49, %s51
      %p55 = scmp.eq.s32.totalorder %s15, 0
      %p56 = por %p54, %p55
      %p57 = scmp.ne.s32.totalorder %s49, %s51
      %p58 = scmp.eq.s32.totalorder %s20, 1
      %p59 = por %p57, %p58
      %p60 = scmp.ne.s32.totalorder %s51, %s52
      %p61 = scmp.eq.s32.totalorder %s20, 0
      %p62 = por %p60, %p61
      %p63 = scmp.ne.s32.totalorder %s51, %s52
      %p64 = scmp.eq.s32.totalorder %s21, 1
      %p65 = por %p63, %p64
      %p67 = scmp.ne.s32.totalorder %s52, %s66
      %p68 = scmp.eq.s32.totalorder %s21, 0
      %p69 = por %p67, %p68
      %s70 = ssub.s32 %s15, %s22
      %p71 = scmp.eq.s32.totalorder %s70, 0
      %s73 = sadd.s32 %s72, 1
      %s74 = scalar_select %p71, %s72, %s73
      %p77 = pneg %p71
      %p78 = scmp.eq.s32.totalorder %s15, 1
      %p79 = por %p77, %p78
      %p80 = scmp.ne.s32.totalorder %s72, %s75
      %p81 = scmp.eq.s32.totalorder %s15, 0
      %p82 = por %p80, %p81
      %p83 = scmp.ne.s32.totalorder %s72, %s75
      %p84 = scmp.eq.s32.totalorder %s20, 1
      %p85 = por %p83, %p84
      %p86 = scmp.ne.s32.totalorder %s75, %s76
      %p87 = scmp.eq.s32.totalorder %s20, 0
      %p88 = por %p86, %p87
      %p89 = scmp.ne.s32.totalorder %s75, %s76
      %p90 = scmp.eq.s32.totalorder %s21, 1
      %p91 = por %p89, %p90
      %p93 = scmp.ne.s32.totalorder %s76, %s92
      %p94 = scmp.eq.s32.totalorder %s21, 0
      %p95 = por %p93, %p94
      %p96 = scmp.le.s32.totalorder 1, %s15
      %p97 = scmp.lt.s32.totalorder %s15, 3
      %p98 = pnand %p96, %p97
      %p99 = pneg %p98
      // Predicated region
      $region9: #{tpu_custom_call.1} parent=5 // pred_check
        _
      $region10: #{tpu_custom_call.1} parent=5 // pred_check_branch
        %101 = sbr.rel (%p98) target = $region12
      $region11: #{tpu_custom_call.1} parent=5 // pred_region
        %s102 = ssub.s32 %s15, 1
        // Predicated region
        $region13: #{tpu_custom_call.1} parent=11 // pred_check
          %p103 = pneg %p62
        $region14: #{tpu_custom_call.1} parent=11 // pred_check_branch
          %105 = sbr.rel (%p103) target = $region16
        $region15: #{tpu_custom_call.1} parent=11 // pred_region
          %107 = vsyncadd [#allocation6], 0
          %s109 = sshll.u32 %s1, 4
          %s110 = int_to_ptr.hbm [resolvable:$true] %s109
          %112 = dma.hbm_to_smem %s110, 16, [#allocation7], [#allocation6]
        $region16: #{tpu_custom_call.1} parent=11 // pred_fallthru
          _
      $region12: #{tpu_custom_call.1} parent=5 // pred_fallthru
        _
      %p113 = scmp.lt.s32.totalorder %s15, 2
      // Predicated region
      $region17: #{tpu_custom_call.1} parent=5 // pred_check
        %p114 = pneg %p113
      $region18: #{tpu_custom_call.1} parent=5 // pred_check_branch
        %116 = sbr.rel (%p114) target = $region20
      $region19: #{tpu_custom_call.1} parent=5 // pred_region
        // Predicated region
        $region21: #{tpu_custom_call.1} parent=19 // pred_check
          %p117 = pneg %p35
        $region22: #{tpu_custom_call.1} parent=19 // pred_check_branch
          %119 = sbr.rel (%p117) target = $region24
        $region23: #{tpu_custom_call.1} parent=19 // pred_region
          %s120 = sand.u32 %s25, 1
          %s121 = scalar_lea.sflag [#allocation4], %s120
          %s122 = sand.u32 %s25, 1
          %s123 = smul.addr %s122, 64
          %s124 = scalar_lea.vmem [#allocation3], %s123
          %126 = vsyncadd %s121, 0
          %s127 = smul.addr %s15, 8
          %s128 = smul.addr %s127, 8
          %s129 = scalar_lea.hbm %s0, %s128
          %s130 = sshll.u32 %s129, 4
          %s131 = int_to_ptr.hbm [resolvable:$true] %s130
          %s132 = sshll.u32 %s124, 4
          %s133 = int_to_ptr.vmem [resolvable:$true] %s132
          %138 = dma.hbm_to_vmem [thread:$0]  %s131, 1024, %s133, %s121, 128, 128, 8
        $region24: #{tpu_custom_call.1} parent=19 // pred_fallthru
          _
      $region20: #{tpu_custom_call.1} parent=5 // pred_fallthru
        _
      %p139 = scmp.le.s32.totalorder 1, %s15
      %p140 = scmp.lt.s32.totalorder %s15, 3
      %p141 = pnand %p139, %p140
      %p142 = pneg %p141
      // Predicated region
      $region25: #{tpu_custom_call.1} parent=5 // pred_check
        _
      $region26: #{tpu_custom_call.1} parent=5 // pred_check_branch
        %144 = sbr.rel (%p141) target = $region28
      $region27: #{tpu_custom_call.1} parent=5 // pred_region
        %s145 = ssub.s32 %s15, 1
        %s146 = sand.u32 %s28, 1
        %s147 = scalar_lea.sflag [#allocation4], %s146
        %s148 = sand.u32 %s28, 1
        %s149 = smul.addr %s148, 64
        %s150 = scalar_lea.vmem [#allocation3], %s149
        // Predicated region
        $region29: #{tpu_custom_call.1} parent=27 // pred_check
          %p151 = pneg %p41
        $region30: #{tpu_custom_call.1} parent=27 // pred_check_branch
          %153 = sbr.rel (%p151) target = $region32
        $region31: #{tpu_custom_call.1} parent=27 // pred_region
          %155 = dma.done %s147, 1024
        $region32: #{tpu_custom_call.1} parent=27 // pred_fallthru
          _
        // Predicated region
        $region33: #{tpu_custom_call.1} parent=27 // pred_check
          %p156 = pneg %p62
        $region34: #{tpu_custom_call.1} parent=27 // pred_check_branch
          %158 = sbr.rel (%p156) target = $region36
        $region35: #{tpu_custom_call.1} parent=27 // pred_region
          %160 = dma.done [#allocation6], 16
        $region36: #{tpu_custom_call.1} parent=27 // pred_fallthru
          _
        %161 = sfence
        %s162 = sand.u32 %s28, 1
        %s163 = scalar_lea.sflag [#allocation4], %s162
        %s164 = sand.u32 %s28, 1
        %s165 = smul.addr %s164, 64
        %s166 = scalar_lea.vmem [#allocation3], %s165
        %p167 = pneg %p41
        %p168 = pneg %p38
        %p169 = pneg %p62
        %p170 = pneg %p59
        %p171 = pneg %p88
        %p172 = pneg %p85
        %s173 = sand.u32 %s75, 1
        %s174 = scalar_lea.sflag [#allocation5], %s173
        %s175 = sand.u32 %s75, 1
        %s176 = smul.addr %s175, 16
        %s177 = scalar_lea.vmem [#allocation8], %s176
        %vm178 = vcmask 146432
        %179 = vst.msk [vmem:[#allocation2] sm:$0xff] %vm178, 0.0
        %180 = vst.msk [vmem:[#allocation2 + $0x8] sm:$0xff] %vm178, 0.0
        %vm181 = vcmask 140288
        %182 = vst.msk [vmem:[#allocation2 + $0x10] sm:$0x3] %vm181, 0.0
        %183 = vst.msk [vmem:[#allocation2 + $0x18] sm:$0xff] %vm178, 0.0
        %184 = vst.msk [vmem:[#allocation2 + $0x20] sm:$0xff] %vm178, 0.0
        %185 = vst.msk [vmem:[#allocation2 + $0x28] sm:$0x3] %vm181, 0.0
        %186 = vst.msk [vmem:[#allocation2 + $0x30] sm:$0xff] %vm178, 0.0
        %187 = vst.msk [vmem:[#allocation2 + $0x38] sm:$0xff] %vm178, 0.0
        %188 = vst.msk [vmem:[#allocation2 + $0x40] sm:$0x3] %vm181, 0.0
        %189 = vst.msk [vmem:[#allocation2 + $0x48] sm:$0xff] %vm178, 0.0
        %190 = vst.msk [vmem:[#allocation2 + $0x50] sm:$0xff] %vm178, 0.0
        %191 = vst.msk [vmem:[#allocation2 + $0x58] sm:$0x3] %vm181, 0.0
        %v192 = vld [vmem:[%s150] sm:$0xff]
        %v193 = vld [vmem:[%s150 + $0x8] sm:$0xff]
        %196 = vrot.lane.b32.xlu0 %v192, 1
        %v197 = vpop.permute.xlu0 %196
        %198 = vrot.lane.b32.xlu0 %v193, 1
        %v199 = vpop.permute.xlu0 %198
        %vm202 = vcmask 138248
        %203 = vst.msk [vmem:[#allocation2 + $0x1] sm:$0xff] %vm202, %v197
        %204 = vst.msk [vmem:[#allocation2 + $0x9] sm:$0xff] %vm202, %v199
        %v205 = vld [vmem:[#allocation2] sm:$0xff]
        %v206 = vld [vmem:[#allocation2 + $0x8] sm:$0xff]
        %v207 = vld [vmem:[#allocation2 + $0x10] sm:$0x3]
        %s208 = sld [smem:[#allocation7]]
        %v209 = vstv %s208
        %v210 = vmul.f32 %v209, %v205
        %v211 = vmul.f32 %v209, %v206
        %v212 = vadd.f32 %v210, 0.0
        %v213 = vadd.f32 %v211, 0.0
        %s214 = sld [smem:[#allocation7 + $0x1]]
        %v215 = vstv %s214
        %v216 = vmul.f32 %v215, %v205
        %v217 = vmul.f32 %v215, %v206
        %220 = vrot.lane.b32.xlu0 %v216, 127
        %v221 = vpop.permute.xlu0 %220
        %222 = vrot.lane.b32.xlu0 %v217, 127
        %v223 = vpop.permute.xlu0 %222
        %v226 = vadd.f32 %v212, %v221
        %v227 = vadd.f32 %v213, %v223
        %s228 = sld [smem:[#allocation7 + $0x2]]
        %v229 = vstv %s228
        %v230 = vmul.f32 %v229, %v205
        %v231 = vmul.f32 %v229, %v206
        %234 = vrot.lane.b32.xlu0 %v230, 126
        %v235 = vpop.permute.xlu0 %234
        %236 = vrot.lane.b32.xlu0 %v231, 126
        %v237 = vpop.permute.xlu0 %236
        %v240 = vadd.f32 %v226, %v235
        %v241 = vadd.f32 %v227, %v237
        %s242 = sld [smem:[#allocation7 + $0x3]]
        %v243 = vstv %s242
        %v244 = vmul.f32 %v243, %v205
        %v245 = vmul.f32 %v243, %v206
        %v246 = vmul.f32 %v243, %v207
        %vm250 = vcmask 1046528
        %v251 = vrot.slane %v244, 1
        %v252 = vrot.slane %v245, 1
        %v253 = vsel %vm250, %v251, %v252
        %v254 = vrot.slane %v246, 1
        %v255 = vsel %vm250, %v252, %v254
        %v258 = vadd.f32 %v240, %v253
        %v259 = vadd.f32 %v241, %v255
        %s260 = sld [smem:[#allocation7 + $0x4]]
        %v261 = vstv %s260
        %v262 = vmul.f32 %v261, %v205
        %v263 = vmul.f32 %v261, %v206
        %v264 = vmul.f32 %v261, %v207
        %v268 = vrot.slane %v262, 1
        %v269 = vrot.slane %v263, 1
        %v270 = vsel %vm250, %v268, %v269
        %v271 = vrot.slane %v264, 1
        %v272 = vsel %vm250, %v269, %v271
        %273 = vrot.lane.b32.xlu0 %v270, 127
        %v274 = vpop.permute.xlu0 %273
        %275 = vrot.lane.b32.xlu0 %v272, 127
        %v276 = vpop.permute.xlu0 %275
        %v279 = vadd.f32 %v258, %v274
        %v280 = vadd.f32 %v259, %v276
        %s281 = sld [smem:[#allocation7 + $0x5]]
        %v282 = vstv %s281
        %v283 = vmul.f32 %v282, %v205
        %v284 = vmul.f32 %v282, %v206
        %v285 = vmul.f32 %v282, %v207
        %v289 = vrot.slane %v283, 1
        %v290 = vrot.slane %v284, 1
        %v291 = vsel %vm250, %v289, %v290
        %v292 = vrot.slane %v285, 1
        %v293 = vsel %vm250, %v290, %v292
        %294 = vrot.lane.b32.xlu0 %v291, 126
        %v295 = vpop.permute.xlu0 %294
        %296 = vrot.lane.b32.xlu0 %v293, 126
        %v297 = vpop.permute.xlu0 %296
        %v300 = vadd.f32 %v279, %v295
        %v301 = vadd.f32 %v280, %v297
        %s302 = sld [smem:[#allocation7 + $0x6]]
        %v303 = vstv %s302
        %v304 = vmul.f32 %v303, %v205
        %v305 = vmul.f32 %v303, %v206
        %v306 = vmul.f32 %v303, %v207
        %vm310 = vcmask 1045504
        %v311 = vrot.slane %v304, 2
        %v312 = vrot.slane %v305, 2
        %v313 = vsel %vm310, %v311, %v312
        %v314 = vrot.slane %v306, 2
        %v315 = vsel %vm310, %v312, %v314
        %v318 = vadd.f32 %v300, %v313
        %v319 = vadd.f32 %v301, %v315
        %s320 = sld [smem:[#allocation7 + $0x7]]
        %v321 = vstv %s320
        %v322 = vmul.f32 %v321, %v205
        %v323 = vmul.f32 %v321, %v206
        %v324 = vmul.f32 %v321, %v207
        %v328 = vrot.slane %v322, 2
        %v329 = vrot.slane %v323, 2
        %v330 = vsel %vm310, %v328, %v329
        %v331 = vrot.slane %v324, 2
        %v332 = vsel %vm310, %v329, %v331
        %333 = vrot.lane.b32.xlu0 %v330, 127
        %v334 = vpop.permute.xlu0 %333
        %335 = vrot.lane.b32.xlu0 %v332, 127
        %v336 = vpop.permute.xlu0 %335
        %v339 = vadd.f32 %v318, %v334
        %v340 = vadd.f32 %v319, %v336
        %s341 = sld [smem:[#allocation7 + $0x8]]
        %v342 = vstv %s341
        %v343 = vmul.f32 %v342, %v205
        %v344 = vmul.f32 %v342, %v206
        %v345 = vmul.f32 %v342, %v207
        %v349 = vrot.slane %v343, 2
        %v350 = vrot.slane %v344, 2
        %v351 = vsel %vm310, %v349, %v350
        %v352 = vrot.slane %v345, 2
        %v353 = vsel %vm310, %v350, %v352
        %354 = vrot.lane.b32.xlu0 %v351, 126
        %v355 = vpop.permute.xlu0 %354
        %356 = vrot.lane.b32.xlu0 %v353, 126
        %v357 = vpop.permute.xlu0 %356
        %v360 = vadd.f32 %v339, %v355
        %v361 = vadd.f32 %v340, %v357
        %s362 = scalar_lea.vmem %s150, 16 [#allocation3]
        %v363 = vld [vmem:[%s362] sm:$0xff]
        %v364 = vld [vmem:[%s362 + $0x8] sm:$0xff]
        %367 = vrot.lane.b32.xlu0 %v363, 1
        %v368 = vpop.permute.xlu0 %367
        %369 = vrot.lane.b32.xlu0 %v364, 1
        %v370 = vpop.permute.xlu0 %369
        %s373 = scalar_lea.vmem [#allocation2], 24
        %374 = vst.msk [vmem:[%s373 + $0x1] sm:$0xff] %vm202, %v368
        %375 = vst.msk [vmem:[%s373 + $0x9] sm:$0xff] %vm202, %v370
        %v376 = vld [vmem:[%s373] sm:$0xff]
        %v377 = vld [vmem:[%s373 + $0x8] sm:$0xff]
        %v378 = vld [vmem:[%s373 + $0x10] sm:$0x3]
        %s379 = sld [smem:[#allocation7 + $0x9]]
        %v380 = vstv %s379
        %v381 = vmul.f32 %v380, %v376
        %v382 = vmul.f32 %v380, %v377
        %v383 = vadd.f32 %v360, %v381
        %v384 = vadd.f32 %v361, %v382
        %s385 = sld [smem:[#allocation7 + $0xa]]
        %v386 = vstv %s385
        %v387 = vmul.f32 %v386, %v376
        %v388 = vmul.f32 %v386, %v377
        %391 = vrot.lane.b32.xlu0 %v387, 127
        %v392 = vpop.permute.xlu0 %391
        %393 = vrot.lane.b32.xlu0 %v388, 127
        %v394 = vpop.permute.xlu0 %393
        %v397 = vadd.f32 %v383, %v392
        %v398 = vadd.f32 %v384, %v394
        %s399 = sld [smem:[#allocation7 + $0xb]]
        %v400 = vstv %s399
        %v401 = vmul.f32 %v400, %v376
        %v402 = vmul.f32 %v400, %v377
        %405 = vrot.lane.b32.xlu0 %v401, 126
        %v406 = vpop.permute.xlu0 %405
        %407 = vrot.lane.b32.xlu0 %v402, 126
        %v408 = vpop.permute.xlu0 %407
        %v411 = vadd.f32 %v397, %v406
        %v412 = vadd.f32 %v398, %v408
        %s413 = sld [smem:[#allocation7 + $0xc]]
        %v414 = vstv %s413
        %v415 = vmul.f32 %v414, %v376
        %v416 = vmul.f32 %v414, %v377
        %v417 = vmul.f32 %v414, %v378
        %v421 = vrot.slane %v415, 1
        %v422 = vrot.slane %v416, 1
        %v423 = vsel %vm250, %v421, %v422
        %v424 = vrot.slane %v417, 1
        %v425 = vsel %vm250, %v422, %v424
        %v428 = vadd.f32 %v411, %v423
        %v429 = vadd.f32 %v412, %v425
        %s430 = sld [smem:[#allocation7 + $0xd]]
        %v431 = vstv %s430
        %v432 = vmul.f32 %v431, %v376
        %v433 = vmul.f32 %v431, %v377
        %v434 = vmul.f32 %v431, %v378
        %v438 = vrot.slane %v432, 1
        %v439 = vrot.slane %v433, 1
        %v440 = vsel %vm250, %v438, %v439
        %v441 = vrot.slane %v434, 1
        %v442 = vsel %vm250, %v439, %v441
        %443 = vrot.lane.b32.xlu0 %v440, 127
        %v444 = vpop.permute.xlu0 %443
        %445 = vrot.lane.b32.xlu0 %v442, 127
        %v446 = vpop.permute.xlu0 %445
        %v449 = vadd.f32 %v428, %v444
        %v450 = vadd.f32 %v429, %v446
        %s451 = sld [smem:[#allocation7 + $0xe]]
        %v452 = vstv %s451
        %v453 = vmul.f32 %v452, %v376
        %v454 = vmul.f32 %v452, %v377
        %v455 = vmul.f32 %v452, %v378
        %v459 = vrot.slane %v453, 1
        %v460 = vrot.slane %v454, 1
        %v461 = vsel %vm250, %v459, %v460
        %v462 = vrot.slane %v455, 1
        %v463 = vsel %vm250, %v460, %v462
        %464 = vrot.lane.b32.xlu0 %v461, 126
        %v465 = vpop.permute.xlu0 %464
        %466 = vrot.lane.b32.xlu0 %v463, 126
        %v467 = vpop.permute.xlu0 %466
        %v470 = vadd.f32 %v449, %v465
        %v471 = vadd.f32 %v450, %v467
        %s472 = sld [smem:[#allocation7 + $0xf]]
        %v473 = vstv %s472
        %v474 = vmul.f32 %v473, %v376
        %v475 = vmul.f32 %v473, %v377
        %v476 = vmul.f32 %v473, %v378
        %v480 = vrot.slane %v474, 2
        %v481 = vrot.slane %v475, 2
        %v482 = vsel %vm310, %v480, %v481
        %v483 = vrot.slane %v476, 2
        %v484 = vsel %vm310, %v481, %v483
        %v487 = vadd.f32 %v470, %v482
        %v488 = vadd.f32 %v471, %v484
        %s489 = sld [smem:[#allocation7 + $0x10]]
        %v490 = vstv %s489
        %v491 = vmul.f32 %v490, %v376
        %v492 = vmul.f32 %v490, %v377
        %v493 = vmul.f32 %v490, %v378
        %v497 = vrot.slane %v491, 2
        %v498 = vrot.slane %v492, 2
        %v499 = vsel %vm310, %v497, %v498
        %v500 = vrot.slane %v493, 2
        %v501 = vsel %vm310, %v498, %v500
        %502 = vrot.lane.b32.xlu0 %v499, 127
        %v503 = vpop.permute.xlu0 %502
        %504 = vrot.lane.b32.xlu0 %v501, 127
        %v505 = vpop.permute.xlu0 %504
        %v508 = vadd.f32 %v487, %v503
        %v509 = vadd.f32 %v488, %v505
        %s510 = sld [smem:[#allocation7 + $0x11]]
        %v511 = vstv %s510
        %v512 = vmul.f32 %v511, %v376
        %v513 = vmul.f32 %v511, %v377
        %v514 = vmul.f32 %v511, %v378
        %v518 = vrot.slane %v512, 2
        %v519 = vrot.slane %v513, 2
        %v520 = vsel %vm310, %v518, %v519
        %v521 = vrot.slane %v514, 2
        %v522 = vsel %vm310, %v519, %v521
        %523 = vrot.lane.b32.xlu0 %v520, 126
        %v524 = vpop.permute.xlu0 %523
        %525 = vrot.lane.b32.xlu0 %v522, 126
        %v526 = vpop.permute.xlu0 %525
        %v529 = vadd.f32 %v508, %v524
        %v530 = vadd.f32 %v509, %v526
        %s531 = scalar_lea.vmem %s150, 32 [#allocation3]
        %v532 = vld [vmem:[%s531] sm:$0xff]
        %v533 = vld [vmem:[%s531 + $0x8] sm:$0xff]
        %536 = vrot.lane.b32.xlu0 %v532, 1
        %v537 = vpop.permute.xlu0 %536
        %538 = vrot.lane.b32.xlu0 %v533, 1
        %v539 = vpop.permute.xlu0 %538
        %s542 = scalar_lea.vmem [#allocation2], 48
        %543 = vst.msk [vmem:[%s542 + $0x1] sm:$0xff] %vm202, %v537
        %544 = vst.msk [vmem:[%s542 + $0x9] sm:$0xff] %vm202, %v539
        %v545 = vld [vmem:[%s542] sm:$0xff]
        %v546 = vld [vmem:[%s542 + $0x8] sm:$0xff]
        %v547 = vld [vmem:[%s542 + $0x10] sm:$0x3]
        %s548 = sld [smem:[#allocation7 + $0x12]]
        %v549 = vstv %s548
        %v550 = vmul.f32 %v549, %v545
        %v551 = vmul.f32 %v549, %v546
        %v552 = vadd.f32 %v529, %v550
        %v553 = vadd.f32 %v530, %v551
        %s554 = sld [smem:[#allocation7 + $0x13]]
        %v555 = vstv %s554
        %v556 = vmul.f32 %v555, %v545
        %v557 = vmul.f32 %v555, %v546
        %560 = vrot.lane.b32.xlu0 %v556, 127
        %v561 = vpop.permute.xlu0 %560
        %562 = vrot.lane.b32.xlu0 %v557, 127
        %v563 = vpop.permute.xlu0 %562
        %v566 = vadd.f32 %v552, %v561
        %v567 = vadd.f32 %v553, %v563
        %s568 = sld [smem:[#allocation7 + $0x14]]
        %v569 = vstv %s568
        %v570 = vmul.f32 %v569, %v545
        %v571 = vmul.f32 %v569, %v546
        %574 = vrot.lane.b32.xlu0 %v570, 126
        %v575 = vpop.permute.xlu0 %574
        %576 = vrot.lane.b32.xlu0 %v571, 126
        %v577 = vpop.permute.xlu0 %576
        %v580 = vadd.f32 %v566, %v575
        %v581 = vadd.f32 %v567, %v577
        %s582 = sld [smem:[#allocation7 + $0x15]]
        %v583 = vstv %s582
        %v584 = vmul.f32 %v583, %v545
        %v585 = vmul.f32 %v583, %v546
        %v586 = vmul.f32 %v583, %v547
        %v590 = vrot.slane %v584, 1
        %v591 = vrot.slane %v585, 1
        %v592 = vsel %vm250, %v590, %v591
        %v593 = vrot.slane %v586, 1
        %v594 = vsel %vm250, %v591, %v593
        %v597 = vadd.f32 %v580, %v592
        %v598 = vadd.f32 %v581, %v594
        %s599 = sld [smem:[#allocation7 + $0x16]]
        %v600 = vstv %s599
        %v601 = vmul.f32 %v600, %v545
        %v602 = vmul.f32 %v600, %v546
        %v603 = vmul.f32 %v600, %v547
        %v607 = vrot.slane %v601, 1
        %v608 = vrot.slane %v602, 1
        %v609 = vsel %vm250, %v607, %v608
        %v610 = vrot.slane %v603, 1
        %v611 = vsel %vm250, %v608, %v610
        %612 = vrot.lane.b32.xlu0 %v609, 127
        %v613 = vpop.permute.xlu0 %612
        %614 = vrot.lane.b32.xlu0 %v611, 127
        %v615 = vpop.permute.xlu0 %614
        %v618 = vadd.f32 %v597, %v613
        %v619 = vadd.f32 %v598, %v615
        %s620 = sld [smem:[#allocation7 + $0x17]]
        %v621 = vstv %s620
        %v622 = vmul.f32 %v621, %v545
        %v623 = vmul.f32 %v621, %v546
        %v624 = vmul.f32 %v621, %v547
        %v628 = vrot.slane %v622, 1
        %v629 = vrot.slane %v623, 1
        %v630 = vsel %vm250, %v628, %v629
        %v631 = vrot.slane %v624, 1
        %v632 = vsel %vm250, %v629, %v631
        %633 = vrot.lane.b32.xlu0 %v630, 126
        %v634 = vpop.permute.xlu0 %633
        %635 = vrot.lane.b32.xlu0 %v632, 126
        %v636 = vpop.permute.xlu0 %635
        %v639 = vadd.f32 %v618, %v634
        %v640 = vadd.f32 %v619, %v636
        %s641 = sld [smem:[#allocation7 + $0x18]]
        %v642 = vstv %s641
        %v643 = vmul.f32 %v642, %v545
        %v644 = vmul.f32 %v642, %v546
        %v645 = vmul.f32 %v642, %v547
        %v649 = vrot.slane %v643, 2
        %v650 = vrot.slane %v644, 2
        %v651 = vsel %vm310, %v649, %v650
        %v652 = vrot.slane %v645, 2
        %v653 = vsel %vm310, %v650, %v652
        %v656 = vadd.f32 %v639, %v651
        %v657 = vadd.f32 %v640, %v653
        %s658 = sld [smem:[#allocation7 + $0x19]]
        %v659 = vstv %s658
        %v660 = vmul.f32 %v659, %v545
        %v661 = vmul.f32 %v659, %v546
        %v662 = vmul.f32 %v659, %v547
        %v666 = vrot.slane %v660, 2
        %v667 = vrot.slane %v661, 2
        %v668 = vsel %vm310, %v666, %v667
        %v669 = vrot.slane %v662, 2
        %v670 = vsel %vm310, %v667, %v669
        %671 = vrot.lane.b32.xlu0 %v668, 127
        %v672 = vpop.permute.xlu0 %671
        %673 = vrot.lane.b32.xlu0 %v670, 127
        %v674 = vpop.permute.xlu0 %673
        %v677 = vadd.f32 %v656, %v672
        %v678 = vadd.f32 %v657, %v674
        %s679 = sld [smem:[#allocation7 + $0x1a]]
        %v680 = vstv %s679
        %v681 = vmul.f32 %v680, %v545
        %v682 = vmul.f32 %v680, %v546
        %v683 = vmul.f32 %v680, %v547
        %v687 = vrot.slane %v681, 2
        %v688 = vrot.slane %v682, 2
        %v689 = vsel %vm310, %v687, %v688
        %v690 = vrot.slane %v683, 2
        %v691 = vsel %vm310, %v688, %v690
        %692 = vrot.lane.b32.xlu0 %v689, 126
        %v693 = vpop.permute.xlu0 %692
        %694 = vrot.lane.b32.xlu0 %v691, 126
        %v695 = vpop.permute.xlu0 %694
        %v698 = vadd.f32 %v677, %v693
        %v699 = vadd.f32 %v678, %v695
        %s700 = scalar_lea.vmem %s150, 48 [#allocation3]
        %v701 = vld [vmem:[%s700] sm:$0xff]
        %v702 = vld [vmem:[%s700 + $0x8] sm:$0xff]
        %705 = vrot.lane.b32.xlu0 %v701, 1
        %v706 = vpop.permute.xlu0 %705
        %707 = vrot.lane.b32.xlu0 %v702, 1
        %v708 = vpop.permute.xlu0 %707
        %s711 = scalar_lea.vmem [#allocation2], 72
        %712 = vst.msk [vmem:[%s711 + $0x1] sm:$0xff] %vm202, %v706
        %713 = vst.msk [vmem:[%s711 + $0x9] sm:$0xff] %vm202, %v708
        %v714 = vld [vmem:[%s711] sm:$0xff]
        %v715 = vld [vmem:[%s711 + $0x8] sm:$0xff]
        %v716 = vld [vmem:[%s711 + $0x10] sm:$0x3]
        %s717 = sld [smem:[#allocation7 + $0x1b]]
        %v718 = vstv %s717
        %v719 = vmul.f32 %v718, %v714
        %v720 = vmul.f32 %v718, %v715
        %v721 = vadd.f32 %v698, %v719
        %v722 = vadd.f32 %v699, %v720
        %s723 = sld [smem:[#allocation7 + $0x1c]]
        %v724 = vstv %s723
        %v725 = vmul.f32 %v724, %v714
        %v726 = vmul.f32 %v724, %v715
        %729 = vrot.lane.b32.xlu0 %v725, 127
        %v730 = vpop.permute.xlu0 %729
        %731 = vrot.lane.b32.xlu0 %v726, 127
        %v732 = vpop.permute.xlu0 %731
        %v735 = vadd.f32 %v721, %v730
        %v736 = vadd.f32 %v722, %v732
        %s737 = sld [smem:[#allocation7 + $0x1d]]
        %v738 = vstv %s737
        %v739 = vmul.f32 %v738, %v714
        %v740 = vmul.f32 %v738, %v715
        %743 = vrot.lane.b32.xlu0 %v739, 126
        %v744 = vpop.permute.xlu0 %743
        %745 = vrot.lane.b32.xlu0 %v740, 126
        %v746 = vpop.permute.xlu0 %745
        %v749 = vadd.f32 %v735, %v744
        %v750 = vadd.f32 %v736, %v746
        %s751 = sld [smem:[#allocation7 + $0x1e]]
        %v752 = vstv %s751
        %v753 = vmul.f32 %v752, %v714
        %v754 = vmul.f32 %v752, %v715
        %v755 = vmul.f32 %v752, %v716
        %v759 = vrot.slane %v753, 1
        %v760 = vrot.slane %v754, 1
        %v761 = vsel %vm250, %v759, %v760
        %v762 = vrot.slane %v755, 1
        %v763 = vsel %vm250, %v760, %v762
        %v766 = vadd.f32 %v749, %v761
        %v767 = vadd.f32 %v750, %v763
        %s768 = sld [smem:[#allocation7 + $0x1f]]
        %v769 = vstv %s768
        %v770 = vmul.f32 %v769, %v714
        %v771 = vmul.f32 %v769, %v715
        %v772 = vmul.f32 %v769, %v716
        %v776 = vrot.slane %v770, 1
        %v777 = vrot.slane %v771, 1
        %v778 = vsel %vm250, %v776, %v777
        %v779 = vrot.slane %v772, 1
        %v780 = vsel %vm250, %v777, %v779
        %781 = vrot.lane.b32.xlu0 %v778, 127
        %v782 = vpop.permute.xlu0 %781
        %783 = vrot.lane.b32.xlu0 %v780, 127
        %v784 = vpop.permute.xlu0 %783
        %v787 = vadd.f32 %v766, %v782
        %v788 = vadd.f32 %v767, %v784
        %s789 = sld [smem:[#allocation7 + $0x20]]
        %v790 = vstv %s789
        %v791 = vmul.f32 %v790, %v714
        %v792 = vmul.f32 %v790, %v715
        %v793 = vmul.f32 %v790, %v716
        %v797 = vrot.slane %v791, 1
        %v798 = vrot.slane %v792, 1
        %v799 = vsel %vm250, %v797, %v798
        %v800 = vrot.slane %v793, 1
        %v801 = vsel %vm250, %v798, %v800
        %802 = vrot.lane.b32.xlu0 %v799, 126
        %v803 = vpop.permute.xlu0 %802
        %804 = vrot.lane.b32.xlu0 %v801, 126
        %v805 = vpop.permute.xlu0 %804
        %v808 = vadd.f32 %v787, %v803
        %v809 = vadd.f32 %v788, %v805
        %s810 = sld [smem:[#allocation7 + $0x21]]
        %v811 = vstv %s810
        %v812 = vmul.f32 %v811, %v714
        %v813 = vmul.f32 %v811, %v715
        %v814 = vmul.f32 %v811, %v716
        %v818 = vrot.slane %v812, 2
        %v819 = vrot.slane %v813, 2
        %v820 = vsel %vm310, %v818, %v819
        %v821 = vrot.slane %v814, 2
        %v822 = vsel %vm310, %v819, %v821
        %v825 = vadd.f32 %v808, %v820
        %v826 = vadd.f32 %v809, %v822
        %s827 = sld [smem:[#allocation7 + $0x22]]
        %v828 = vstv %s827
        %v829 = vmul.f32 %v828, %v714
        %v830 = vmul.f32 %v828, %v715
        %v831 = vmul.f32 %v828, %v716
        %v835 = vrot.slane %v829, 2
        %v836 = vrot.slane %v830, 2
        %v837 = vsel %vm310, %v835, %v836
        %v838 = vrot.slane %v831, 2
        %v839 = vsel %vm310, %v836, %v838
        %840 = vrot.lane.b32.xlu0 %v837, 127
        %v841 = vpop.permute.xlu0 %840
        %842 = vrot.lane.b32.xlu0 %v839, 127
        %v843 = vpop.permute.xlu0 %842
        %v846 = vadd.f32 %v825, %v841
        %v847 = vadd.f32 %v826, %v843
        %s848 = sld [smem:[#allocation7 + $0x23]]
        %v849 = vstv %s848
        %v850 = vmul.f32 %v849, %v714
        %v851 = vmul.f32 %v849, %v715
        %v852 = vmul.f32 %v849, %v716
        %v856 = vrot.slane %v850, 2
        %v857 = vrot.slane %v851, 2
        %v858 = vsel %vm310, %v856, %v857
        %v859 = vrot.slane %v852, 2
        %v860 = vsel %vm310, %v857, %v859
        %861 = vrot.lane.b32.xlu0 %v858, 126
        %v862 = vpop.permute.xlu0 %861
        %863 = vrot.lane.b32.xlu0 %v860, 126
        %v864 = vpop.permute.xlu0 %863
        %v867 = vadd.f32 %v846, %v862
        %v868 = vadd.f32 %v847, %v864
        %v869 = vxor.u32 %v867, 2147483648
        %v870 = vxor.u32 %v868, 2147483648
        %v871 = vmul.f32 %v869, 1.442695
        %v872 = vpow.pop %v871
        %v873 = vmul.f32 %v870, 1.442695
        %v874 = vpow.pop %v873
        %v875 = vadd.f32 %v872, 1.0
        %v876 = vadd.f32 %v874, 1.0
        %v877 = vrcp.pop %v875
        %v878 = vmul.f32 %v875, %v877
        %v879 = vsub.f32 1.0, %v878
        %v880 = vmul.f32 %v877, %v879
        %v881 = vadd.f32 %v877, %v880
        %vm882 = vweird.f32 %v875
        %vm883 = vweird.f32 %v877
        %vm884 = vmor %vm882, %vm883
        %v885 = vsel %vm884, %v877, %v881
        %v886 = vand.u32 2147483647, %v875
        %vm887 = vcmp.eq.f32.partialorder %v886, 8.507059e+37
        %v888 = vand.u32 %v875, 2147483648
        %v889 = vor.u32 1.1754944e-38, %v888
        %v890 = vsel %vm887, %v889, %v885
        %v891 = vmul.f32 1.0, %v890
        %v892 = vrcp.pop %v876
        %v893 = vmul.f32 %v876, %v892
        %v894 = vsub.f32 1.0, %v893
        %v895 = vmul.f32 %v892, %v894
        %v896 = vadd.f32 %v892, %v895
        %vm897 = vweird.f32 %v876
        %vm898 = vweird.f32 %v892
        %vm899 = vmor %vm897, %vm898
        %v900 = vsel %vm899, %v892, %v896
        %v901 = vand.u32 2147483647, %v876
        %vm902 = vcmp.eq.f32.partialorder %v901, 8.507059e+37
        %v903 = vand.u32 %v876, 2147483648
        %v904 = vor.u32 1.1754944e-38, %v903
        %v905 = vsel %vm902, %v904, %v900
        %v906 = vmul.f32 1.0, %v905
        %vm907 = vcmask 130048
        %908 = vst.msk [vmem:[%s177] sm:$0xff] %vm907, %v891
        %909 = vst.msk [vmem:[%s177 + $0x8] sm:$0xff] %vm907, %v906
        %s910 = sand.u32 %s75, 1
        %s911 = scalar_lea.sflag [#allocation5], %s910
        %s912 = sand.u32 %s75, 1
        %s913 = smul.addr %s912, 16
        %s914 = scalar_lea.vmem [#allocation8], %s913
        // Predicated region
        $region37: #{tpu_custom_call.1} parent=27 // pred_check
          %p915 = pneg %p85
        $region38: #{tpu_custom_call.1} parent=27 // pred_check_branch
          %917 = sbr.rel (%p915) target = $region40
        $region39: #{tpu_custom_call.1} parent=27 // pred_region
          %919 = vsyncadd %s911, 0
          %s920 = smul.addr %s20, 2
          %s921 = smul.addr %s920, 8
          %s922 = scalar_lea.hbm %s2, %s921
          %s923 = sshll.u32 %s914, 4
          %s924 = int_to_ptr.vmem [resolvable:$true] %s923
          %s925 = sshll.u32 %s922, 4
          %s926 = int_to_ptr.hbm [resolvable:$true] %s925
          %931 = dma.vmem_to_hbm [thread:$0]  %s924, 256, %s926, %s911, 128, 128, 8
        $region40: #{tpu_custom_call.1} parent=27 // pred_fallthru
          _
      $region28: #{tpu_custom_call.1} parent=5 // pred_fallthru
        _
      %p932 = scmp.le.s32.totalorder 2, %s15
      // Predicated region
      $region41: #{tpu_custom_call.1} parent=5 // pred_check
        %p933 = pneg %p932
      $region42: #{tpu_custom_call.1} parent=5 // pred_check_branch
        %935 = sbr.rel (%p933) target = $region44
      $region43: #{tpu_custom_call.1} parent=5 // pred_region
        %s936 = ssub.s32 %s15, 2
        // Predicated region
        $region45: #{tpu_custom_call.1} parent=43 // pred_check
          %p937 = pneg %p91
        $region46: #{tpu_custom_call.1} parent=43 // pred_check_branch
          %939 = sbr.rel (%p937) target = $region48
        $region47: #{tpu_custom_call.1} parent=43 // pred_region
          %s940 = sand.u32 %s76, 1
          %s941 = scalar_lea.sflag [#allocation5], %s940
          %s942 = sand.u32 %s76, 1
          %s943 = smul.addr %s942, 16
          %s944 = scalar_lea.vmem [#allocation8], %s943
          %946 = dma.done %s941, 256
        $region48: #{tpu_custom_call.1} parent=43 // pred_fallthru
          _
      $region44: #{tpu_custom_call.1} parent=5 // pred_fallthru
        _
    $region6: #{tpu_custom_call.1} parent=1 // loop_footer
      %s19 = sadd.s32 1, %s15
    $region7: #{tpu_custom_call.1} parent=1 // loop_footer_branch
      %14 = sbr.rel target = $region3
    $region8: #{tpu_custom_call.1} parent=1 // loop_exit
      _
    %947 = vsyncpa [#allocation4], 1
    %s948 = scalar_lea.sflag [#allocation4], 1
    %949 = vsyncpa %s948, 1
    %950 = vsyncpa [#allocation5], 1
    %s951 = scalar_lea.sflag [#allocation5], 1
    %952 = vsyncpa %s951, 1
    %953 = vsyncpa [#allocation6], 1
    %s954 = scalar_lea.sflag [#allocation6], 1
    %955 = vsyncpa %s954, 1

</llo_original>
